<compile_context>
chip_gen: v7x
topology: tpu7x:2x2x1
jax: 0.10.0
libtpu: 0.0.40
codegen_flags: <defaults>
</compile_context>

<pallas_src>
import functools
import math

import jax
import jax.numpy as jnp
from jax.experimental import pallas as pl
from jax.experimental.pallas import tpu as pltpu


def _reg_sums_kernel(w_ref, o_ref, *, L, block_rows, bpc, n_rows, need_row_mask):
    c = pl.program_id(0)      # parallel chunk (row range; megacore split)
    i = pl.program_id(1)      # row-block within the chunk (reduction axis)

    @pl.when(i == 0)
    def _():
        o_ref[...] = jnp.zeros_like(o_ref)

    w = w_ref[...].astype(jnp.float32)
    rows, cols = w.shape

    if need_row_mask:
        # Mask rows past the real data (partial last block / padded virtual grid).
        vblk = c * bpc + i
        row_ids = vblk * block_rows + jax.lax.broadcasted_iota(
            jnp.int32, (rows, cols), 0)
        w = jnp.where(row_ids < n_rows, w, 0.0)

    # (Wf @ D): adjacent-column difference inside each length-L group; the last
    # column of every group (j % L == L-1) is zero, so it is simply dropped by
    # the column mask.  Pure VPU work — no roll / no matmul.
    diff = w[:, : cols - 1] - w[:, 1:cols]                       # (rows, C-1)
    col_ids = jax.lax.broadcasted_iota(jnp.int32, (1, cols - 1), 1)
    keep = (col_ids % L) != (L - 1)
    d2 = jnp.where(keep, diff * diff, 0.0)

    # Per-lane partial sums (sublane reduce only); the cross-lane reduce is
    # deferred to JAX after the last grid step.
    o_ref[0:1, 0 : cols - 1] += jnp.sum(d2, axis=0, keepdims=True)
    o_ref[1:2, :] += jnp.sum(w * w, axis=0, keepdims=True)


def regularization_loss(w, weight_decay, *, target_block_bytes=1 << 20):
    """Pallas implementation of Regularization.regularization_loss for one weight."""
    L = int(w.shape[-3])
    numel = int(w.size)
    R = numel // L

    # Lane-dense packing: view the row-major flat weight as (n_rows, C) with C a
    # multiple of both L (groups never straddle a packed row) and 128 (lanes).
    C = L * 128 // math.gcd(L, 128)
    padded = -(-numel // C) * C
    w_flat = jnp.reshape(w, (-1,))
    if padded != numel:
        # Zero padding is inert for both sums: the real data ends on a group
        # boundary (numel is a multiple of L), and zero diffs/squares add nothing.
        w_flat = jnp.pad(w_flat, (0, padded - numel))
    n_rows = padded // C
    w2d = jnp.reshape(w_flat, (n_rows, C))

    itemsize = jnp.dtype(w.dtype).itemsize
    rows_target = max(8, (target_block_bytes // (C * itemsize)) // 8 * 8)
    if n_rows <= rows_target:
        block_rows, grid_rows = n_rows, 1          # one block: full row extent
    else:
        block_rows = rows_target                   # multiple of 8
        grid_rows = -(-n_rows // block_rows)

    nc = 2 if grid_rows >= 2 else 1                # row split across v7x's 2 TCs
    bpc = -(-grid_rows // nc)                      # row-blocks per chunk
    need_row_mask = nc * bpc * block_rows != n_rows

    if nc * bpc == grid_rows:
        def w_index(c, i):
            return (c * bpc + i, 0)
    else:
        # Clamp virtual blocks past the end onto the last real block; their
        # contribution is zeroed by the in-kernel row mask.
        def w_index(c, i):
            return (jnp.minimum(c * bpc + i, grid_rows - 1), 0)

    kernel = functools.partial(
        _reg_sums_kernel, L=L, block_rows=block_rows, bpc=bpc,
        n_rows=n_rows, need_row_mask=need_row_mask)

    # Output: row 0 = per-lane partial sums of (Wf@D)^2, row 1 = of Wf^2,
    # one lane-dense column stripe of width C per parallel chunk.
    partials = pl.pallas_call(
        kernel,
        out_shape=jax.ShapeDtypeStruct((8, nc * C), jnp.float32),
        grid=(nc, bpc),
        in_specs=[pl.BlockSpec((block_rows, C), w_index)],
        out_specs=pl.BlockSpec((8, C), lambda c, i: (0, c)),
        compiler_params=pltpu.CompilerParams(
            dimension_semantics=("parallel", "arbitrary")),
    )(w2d)

    sum_d = jnp.sum(partials[0, :])
    sum_w = jnp.sum(partials[1, :])
    # NOTE: L == 1 makes (numel - R) == 0 -> same divide-by-zero as the reference.
    loss = (jnp.sqrt(sum_d / (numel - R)) * weight_decay[0]
            + jnp.sqrt(sum_w / numel) * weight_decay[1])
    return loss


def regularization_forward(weight_list, weight_decay):
    """Mirrors Regularization.forward: iterates named weights, but (as in the
    reference code) returns after processing the FIRST 'weight' parameter."""
    for name, w in weight_list:
        if "weight" in name:
            return regularization_loss(w, weight_decay)
    return jnp.float32(0.0)


def _reference_loss(w, weight_decay):
    """Pure-JAX reference, same math as the PyTorch module."""
    L = w.shape[-3]
    eye = jnp.eye(L, dtype=jnp.float32)
    temp = jnp.zeros_like(eye).at[1:, :].set(eye[:-1, :])
    D = (eye - temp).at[-1, -1].set(0.0)
    wf = w.reshape(-1, L).astype(jnp.float32)
    return (jnp.sqrt(jnp.sum((wf @ D) ** 2) / (w.size - wf.shape[0])) * weight_decay[0]
            + jnp.sqrt(jnp.sum(wf ** 2) / w.size) * weight_decay[1])


if __name__ == "__main__":
    key = jax.random.PRNGKey(0)
    k1, k2, k3 = jax.random.split(key, 3)
    weight_decay = [0.001, 0.001]

    # Deterministic synthetic "hypernet" conv weight: [Cout, Cin, Kh, Kw].
    w = jax.random.normal(k1, (16, 8, 3, 3), dtype=jnp.float32)
    weight_list = [("layer1.conv1.weight", w)]

    loss = regularization_forward(weight_list, weight_decay)
    loss = jax.block_until_ready(loss)
    ref = _reference_loss(w, weight_decay)
    assert jnp.allclose(loss, ref, rtol=1e-5, atol=1e-6), (loss, ref)

    # Exercise the tiled / row-masked / clamped-virtual-block / two-chunk
    # (megacore) path by forcing a tiny block budget at a larger shape.
    w2 = jax.random.normal(k2, (64, 16, 3, 3), dtype=jnp.float32)
    loss2 = regularization_loss(w2, weight_decay, target_block_bytes=4096)
    loss2 = jax.block_until_ready(loss2)
    ref2 = _reference_loss(w2, weight_decay)
    assert jnp.allclose(loss2, ref2, rtol=1e-5, atol=1e-6), (loss2, ref2)

    # Exercise the wrapper-side zero-pad path (numel not a multiple of C).
    w3 = jax.random.normal(k3, (8, 4, 3, 5), dtype=jnp.float32)
    loss3 = regularization_loss(w3, weight_decay)
    loss3 = jax.block_until_ready(loss3)
    ref3 = _reference_loss(w3, weight_decay)
    assert jnp.allclose(loss3, ref3, rtol=1e-5, atol=1e-6), (loss3, ref3)

    print("KERNEL_OK")
</pallas_src>

<mosaic_0001>
module attributes {stable_mosaic.version = 11 : i64} {
  func.func @_reg_sums_kernel(%arg0: i32, %arg1: i32, %arg2: memref<9x128xf32, #tpu.memory_space<vmem>>, %arg3: memref<8x128xf32, #tpu.memory_space<vmem>>) attributes {dimension_semantics = [#tpu.dimension_semantics<parallel>, #tpu.dimension_semantics<arbitrary>], iteration_bounds = array<i64: 1, 1>, scalar_prefetch = 0 : i64, scratch_operands = 0 : i64, tpu.core_type = #tpu.core_type<tc>, window_params = [{transform_indices = @transform_0, window_bounds = array<i64: 9, 128>}, {transform_indices = @transform_1, window_bounds = array<i64: 8, 128>}]} {
    %c0_i32 = arith.constant 0 : i32
    %0 = arith.cmpi eq, %arg1, %c0_i32 : i32
    %1 = arith.extui %0 : i1 to i32
    %c0_i32_0 = arith.constant 0 : i32
    %2 = arith.cmpi ne, %1, %c0_i32_0 : i32
    scf.if %2 {
      %cst_15 = arith.constant 0.000000e+00 : f32
      %42 = vector.broadcast %cst_15 : f32 to vector<8x128xf32>
      %c0_16 = arith.constant 0 : index
      %c0_17 = arith.constant 0 : index
      %43 = vector.load %arg3[%c0_16, %c0_17] : memref<8x128xf32, #tpu.memory_space<vmem>>, vector<8x128xf32>
      tpu.vector_store %arg3[%c0_16, %c0_17], %42 {strides = array<i32>} : memref<8x128xf32, #tpu.memory_space<vmem>>, vector<8x128xf32>,
    } else {
    }
    %c0 = arith.constant 0 : index
    %c0_1 = arith.constant 0 : index
    %3 = vector.load %arg2[%c0, %c0_1] : memref<9x128xf32, #tpu.memory_space<vmem>>, vector<9x128xf32>
    %4 = vector.extract_strided_slice %3 {offsets = [0, 0], sizes = [9, 127], strides = [1, 1]} : vector<9x128xf32> to vector<9x127xf32>
    %5 = vector.extract_strided_slice %3 {offsets = [0, 1], sizes = [9, 127], strides = [1, 1]} : vector<9x128xf32> to vector<9x127xf32>
    %6 = arith.subf %4, %5 : vector<9x127xf32>
    %7 = tpu.iota {dimensions = array<i32: 1>} : vector<1x127xi32>
    %c8_i32 = arith.constant 8 : i32
    %c0_i32_2 = arith.constant 0 : i32
    %8 = arith.cmpi eq, %c8_i32, %c0_i32_2 : i32
    %c1_i32 = arith.constant 1 : i32
    %9 = arith.select %8, %c1_i32, %c8_i32 : i32
    %10 = vector.broadcast %9 : i32 to vector<1x127xi32>
    %11 = arith.remsi %7, %10 : vector<1x127xi32>
    %c0_i32_3 = arith.constant 0 : i32
    %12 = vector.broadcast %c0_i32_3 : i32 to vector<1x127xi32>
    %13 = arith.cmpi ne, %11, %12 : vector<1x127xi32>
    %c0_i32_4 = arith.constant 0 : i32
    %14 = vector.broadcast %c0_i32_4 : i32 to vector<1x127xi32>
    %15 = arith.cmpi slt, %11, %14 : vector<1x127xi32>
    %c0_i32_5 = arith.constant 0 : i32
    %16 = arith.cmpi slt, %9, %c0_i32_5 : i32
    %17 = vector.broadcast %16 : i1 to vector<1x127xi1>
    %18 = vector.broadcast %17 : vector<1x127xi1> to vector<1x127xi1>
    %19 = arith.xori %15, %18 : vector<1x127xi1>
    %20 = arith.andi %19, %13 : vector<1x127xi1>
    %21 = vector.broadcast %9 : i32 to vector<1x127xi32>
    %22 = arith.addi %11, %21 : vector<1x127xi32>
    %23 = arith.select %20, %22, %11 : vector<1x127xi1>, vector<1x127xi32>
    %c7_i32 = arith.constant 7 : i32
    %24 = vector.broadcast %c7_i32 : i32 to vector<1x127xi32>
    %25 = arith.cmpi ne, %23, %24 : vector<1x127xi32>
    %26 = arith.mulf %6, %6 : vector<9x127xf32>
    %cst = arith.constant 0.000000e+00 : f32
    %27 = vector.shape_cast %25 : vector<1x127xi1> to vector<1x127xi1>
    %28 = vector.broadcast %27 : vector<1x127xi1> to vector<9x127xi1>
    %29 = vector.broadcast %cst : f32 to vector<9x127xf32>
    %30 = arith.select %28, %26, %29 : vector<9x127xi1>, vector<9x127xf32>
    %c0_6 = arith.constant 0 : index
    %c0_7 = arith.constant 0 : index
    %31 = vector.load %arg3[%c0_6, %c0_7] : memref<8x128xf32, #tpu.memory_space<vmem>>, vector<1x127xf32>
    %cst_8 = arith.constant dense<0.000000e+00> : vector<127xf32>
    %32 = vector.multi_reduction <add>, %30, %cst_8 [0] : vector<9x127xf32> to vector<127xf32>
    %33 = vector.shape_cast %32 : vector<127xf32> to vector<1x127xf32>
    %34 = arith.addf %31, %33 : vector<1x127xf32>
    %c0_9 = arith.constant 0 : index
    %c0_10 = arith.constant 0 : index
    %35 = vector.load %arg3[%c0_9, %c0_10] : memref<8x128xf32, #tpu.memory_space<vmem>>, vector<1x127xf32>
    tpu.vector_store %arg3[%c0_9, %c0_10], %34 {strides = array<i32>} : memref<8x128xf32, #tpu.memory_space<vmem>>, vector<1x127xf32>,
    %c1 = arith.constant 1 : index
    %c0_11 = arith.constant 0 : index
    %36 = vector.load %arg3[%c1, %c0_11] : memref<8x128xf32, #tpu.memory_space<vmem>>, vector<1x128xf32>
    %37 = arith.mulf %3, %3 : vector<9x128xf32>
    %cst_12 = arith.constant dense<0.000000e+00> : vector<128xf32>
    %38 = vector.multi_reduction <add>, %37, %cst_12 [0] : vector<9x128xf32> to vector<128xf32>
    %39 = vector.shape_cast %38 : vector<128xf32> to vector<1x128xf32>
    %40 = arith.addf %36, %39 : vector<1x128xf32>
    %c1_13 = arith.constant 1 : index
    %c0_14 = arith.constant 0 : index
    %41 = vector.load %arg3[%c1_13, %c0_14] : memref<8x128xf32, #tpu.memory_space<vmem>>, vector<1x128xf32>
    tpu.vector_store %arg3[%c1_13, %c0_14], %40 {strides = array<i32>} : memref<8x128xf32, #tpu.memory_space<vmem>>, vector<1x128xf32>,
    return
  }
  func.func @transform_0(%arg0: i32, %arg1: i32) -> (i32, i32) {
    %c1_i32 = arith.constant 1 : i32
    %0 = arith.muli %arg0, %c1_i32 : i32
    %1 = arith.addi %0, %arg1 : i32
    %c0_i32 = arith.constant 0 : i32
    %c0_i32_0 = arith.constant 0 : i32
    return %1, %c0_i32 : i32, i32
  }
  func.func @transform_1(%arg0: i32, %arg1: i32) -> (i32, i32) {
    %c0_i32 = arith.constant 0 : i32
    %c0_i32_0 = arith.constant 0 : i32
    return %c0_i32, %arg0 : i32, i32
  }
}

</mosaic_0001>

<llo_original>
// kernel: tpu_custom_call.1
$region0: #{tpu_custom_call.1}
  #allocation0 [shape = 'u32[]', space=smem, size = 0x4, offset = 0x4, fixed_abs, tag = 'smem constant byte address 0x4 - core index']
  #allocation1 [shape = 'u32[144,128]{1,0:T(1,128)}', space=vmem, size = 0x12000, scoped, tag = 'internal scratch']
  %s0 = inlined_call_operand.hbm [shape: f32[9,128], index: 0, kind: input, shape index: {}]
  %s1 = inlined_call_operand.hbm [shape: f32[8,128], index: 1, kind: output, shape index: {}]
  %s2 = sld [smem:[#allocation0]]
  $region22: #{tpu_custom_call.1} parent=0
    _
  %s4 = ssub.s32 1, %s2
  %s5 = scalar_select 0, %s4, %s2
  $region1: #{tpu_custom_call.1} parent=0
    #allocation2 [shape = 'u8[8192]{0}', space=vmem, size = 0x2000, scoped, tag = 'input window, operand 0, single buffered']
    #allocation3 [shape = 's32[1]{0}', space=sflag, size = 0x4, scoped, tag = 'scoped memory for tpu_custom_call.1']
    #allocation4 [shape = 's32[1]{0}', space=sflag, size = 0x4, scoped, tag = 'scoped memory for tpu_custom_call.1']
    #allocation5 [shape = 'u8[4096]{0}', space=vmem, size = 0x1000, scoped, tag = 'output window, operand 0, single buffered']
    %6 = vsyncpa [#allocation3], 0
    %7 = vsyncpa [#allocation4], 0
    // Predicated region
    $region2: #{tpu_custom_call.1} parent=1 // pred_check
      _
    $region3: #{tpu_custom_call.1} parent=1 // pred_check_branch
      %9 = sbr.rel (0) target = $region5
    $region4: #{tpu_custom_call.1} parent=1 // pred_region
      %s10 = sadd.s32 0, 0
      %s11 = smul.u32 2, %s10
      %s13 = ssub.s32 256, 256
      %14 = vsyncadd [#allocation3], %s13
      %s15 = smul.addr %s11, 128
      %s16 = scalar_lea.hbm %s0, %s15
      %s17 = sshll.u32 [#allocation2], 4
      %s18 = int_to_ptr.vmem [resolvable:$true] %s17
      %23 = dma.hbm_to_vmem [thread:$0]  %s16, 256, %s18, [#allocation3], 128, 128, 8
    $region5: #{tpu_custom_call.1} parent=1 // pred_fallthru
      _
    // Predicated region
    $region6: #{tpu_custom_call.1} parent=1 // pred_check
      _
    $region7: #{tpu_custom_call.1} parent=1 // pred_check_branch
      %25 = sbr.rel (0) target = $region9
    $region8: #{tpu_custom_call.1} parent=1 // pred_region
      %26 = dma.done [#allocation3], 256
    $region9: #{tpu_custom_call.1} parent=1 // pred_fallthru
      _
    %s27 = sadd.s32 0, 0
    %s28 = smul.u32 2, %s27
    %p29 = scmp.eq.s32.totalorder 0, 0
    // Predicated region
    $region10: #{tpu_custom_call.1} parent=1 // pred_check
      %p30 = pneg %p29
    $region11: #{tpu_custom_call.1} parent=1 // pred_check_branch
      %32 = sbr.rel (%p30) target = $region13
    $region12: #{tpu_custom_call.1} parent=1 // pred_region
      %33 = vst [vmem:[#allocation5] sm:$0xff] 0.0
    $region13: #{tpu_custom_call.1} parent=1 // pred_fallthru
      _
    %v34 = vld [vmem:[#allocation2] sm:$0xff]
    %v35 = vld [vmem:[#allocation2 + $0x8] sm:$0x1]
    %38 = vrot.lane.b32.xlu0 %v34, 127
    %v39 = vpop.permute.xlu0 %38
    %40 = vrot.lane.b32.xlu0 %v35, 127
    %v41 = vpop.permute.xlu0 %40
    %v44 = vsub.f32 %v34, %v39
    %v45 = vsub.f32 %v35, %v41
    %v46 = vlaneseq
    %v47 = vand.u32 %v46, 127
    %vm48 = vcmp.lt.s32.totalorder %v47, 0
    %v49 = vsub.s32 0, %v47
    %v50 = vsel %vm48, %v49, %v47
    %v51 = vshrl.u32 %v50, 3
    %v52 = vand.u32 %v50, 7
    %v53 = vsub.s32 0, %v52
    %v54 = vsel %vm48, %v53, %v52
    %vm55 = vcmp.ne.s32.totalorder %v54, 0
    %vm56 = vcmp.lt.s32.totalorder %v54, 0
    %vm57 = vmand %vm56, %vm55
    %v58 = vadd.s32 %v54, 8
    %v59 = vsel %vm57, %v58, %v54
    %vm60 = vcmp.ne.s32.totalorder %v59, 7
    %v61 = vmul.f32 %v44, %v44
    %v62 = vmul.f32 %v45, %v45
    %v63 = vsel %vm60, 1, 0
    %vm64 = vcmp.eq.s32.totalorder %v63, 1
    %v65 = vsel %vm64, %v61, 0.0
    %v66 = vsel %vm64, %v62, 0.0
    %v67 = vld [vmem:[#allocation5] sm:$0x1]
    %vm68 = vcmask 1039360
    %v69 = vsel %vm68, %v65, 0.0
    %vm70 = vcmask 1032192
    %v71 = vsel %vm70, %v66, 0.0
    %v72 = vadd.f32 %v69, %v71
    %v73 = vrot.slane %v72, 4
    %v74 = vadd.f32 %v72, %v73
    %v75 = vrot.slane %v74, 2
    %v76 = vadd.f32 %v74, %v75
    %v77 = vrot.slane %v76, 1
    %v78 = vadd.f32 %v76, %v77
    %v79 = vadd.f32 %v67, %v78
    %80 = vst.msk [vmem:[#allocation5] sm:$0x1] %vm70, %v79
    %v81 = vld [vmem:[#allocation5 + $0x1] sm:$0x1]
    %v82 = vmul.f32 %v34, %v34
    %v83 = vmul.f32 %v35, %v35
    %vm84 = vcmask 1040384
    %v85 = vsel %vm84, %v83, 0.0
    %v86 = vadd.f32 %v82, %v85
    %v87 = vrot.slane %v86, 4
    %v88 = vadd.f32 %v86, %v87
    %v89 = vrot.slane %v88, 2
    %v90 = vadd.f32 %v88, %v89
    %v91 = vrot.slane %v90, 1
    %v92 = vadd.f32 %v90, %v91
    %v93 = vadd.f32 %v81, %v92
    %94 = vst [vmem:[#allocation5 + $0x1] sm:$0x1] %v93
    // Predicated region
    $region14: #{tpu_custom_call.1} parent=1 // pred_check
      _
    $region15: #{tpu_custom_call.1} parent=1 // pred_check_branch
      %96 = sbr.rel (0) target = $region17
    $region16: #{tpu_custom_call.1} parent=1 // pred_region
      %s98 = ssub.s32 128, 128
      %99 = vsyncadd [#allocation4], %s98
      %s101 = sshll.u32 [#allocation5], 4
      %s102 = int_to_ptr.vmem [resolvable:$true] %s101
      %104 = dma.vmem_to_hbm [thread:$0]  %s102, 128, %s1, [#allocation4]
    $region17: #{tpu_custom_call.1} parent=1 // pred_fallthru
      _
    // Predicated region
    $region18: #{tpu_custom_call.1} parent=1 // pred_check
      _
    $region19: #{tpu_custom_call.1} parent=1 // pred_check_branch
      %106 = sbr.rel (0) target = $region21
    $region20: #{tpu_custom_call.1} parent=1 // pred_region
      %107 = dma.done [#allocation4], 128
    $region21: #{tpu_custom_call.1} parent=1 // pred_fallthru
      _
    %108 = vsyncpa [#allocation3], 1
    %109 = vsyncpa [#allocation4], 1

</llo_original>
